<compile_context>
chip_gen: v6e
topology: v6e:2x2x1
jax: 0.10.0
libtpu: 0.0.40
codegen_flags: <defaults>
</compile_context>

<pallas_src>
import math

import jax
import jax.numpy as jnp
from jax.experimental import pallas as pl
from jax.experimental.pallas import tpu as pltpu

# ---------------- configuration (small, consistent with the module) ---------
BATCH = 32      # batch_size = y.size(0)  (>=2 grid tiles so v7x's 2nd TC works)
ZDIM = 32       # args.zdim  (z is (batch, zdim))
Y_DIM = 16      # args.y_dim (context, y.view(-1, y_dim))
HIDDEN = 64     # conditioner MLP hidden width
N_LAYERS = 2    # number of coupling layers in the NDE model
HALF = ZDIM // 2
_LOG_2PI = math.log(2.0 * math.pi)

# Packed parameter-slab row offsets (all multiples of 8 -> in-kernel static
# slices never start mid sublane-tile).
_R_W1Z = 0                       # (HALF,   HIDDEN)
_R_W1Y = _R_W1Z + HALF           # (Y_DIM,  HIDDEN)
_R_B1 = _R_W1Y + Y_DIM           # (1,      HIDDEN)  padded to 8 rows
_R_B1_PAD = 8
_R_W2 = _R_B1 + _R_B1_PAD        # (HIDDEN, HIDDEN)  cols ZDIM: zero-padded
_R_B2 = _R_W2 + HIDDEN           # (1,      HIDDEN)  padded to 8 rows
_R_B2_PAD = 8
_R_TOTAL = _R_B2 + _R_B2_PAD     # 112 rows per layer


# ----------------------------- Pallas kernel --------------------------------
def _latent_flow_logprob_kernel(y_ref, z_ref, p_ref, logpz_ref):
    """Per-batch-tile log p(z | y); lane-dense (1, 1, TB) output block."""
    ctx = y_ref[...].astype(jnp.float32)          # (TB, Y_DIM)
    z = z_ref[...].astype(jnp.float32)            # (TB, ZDIM)
    za = z[:, :HALF]                              # pass-through half
    zb = z[:, HALF:]                              # transformed half

    logdet = jnp.zeros((za.shape[0], 1), jnp.float32)

    # Static unrolled loop over coupling layers (N_LAYERS is compile-time).
    for k in range(N_LAYERS):
        # Static, sublane-aligned views into the VMEM-resident parameter slab.
        w1z = p_ref[k, _R_W1Z:_R_W1Z + HALF, :].astype(jnp.float32)
        w1y = p_ref[k, _R_W1Y:_R_W1Y + Y_DIM, :].astype(jnp.float32)
        b1 = p_ref[k, _R_B1:_R_B1 + 1, :].astype(jnp.float32)
        w2 = p_ref[k, _R_W2:_R_W2 + HIDDEN, :].astype(jnp.float32)
        b2 = p_ref[k, _R_B2:_R_B2 + 1, :].astype(jnp.float32)

        # h = tanh([za, ctx] @ W1 + b1): two MXU pushes, no lane concat.
        h = jnp.tanh(
            jnp.dot(za, w1z, preferred_element_type=jnp.float32)
            + jnp.dot(ctx, w1y, preferred_element_type=jnp.float32)
            + b1)                                            # (TB, HIDDEN)

        # Single fused W2 push; shift / pre-tanh log-scale are static lane
        # slices of one 64-lane result (stays inside a vreg).
        p = jnp.dot(h, w2, preferred_element_type=jnp.float32) + b2
        shift = p[:, :HALF]
        log_scale = jnp.tanh(p[:, HALF:ZDIM])

        # inverse affine coupling (data -> noise direction)
        zb_new = (zb - shift) * jnp.exp(-log_scale)
        logdet = logdet - jnp.sum(log_scale, axis=-1, keepdims=True)

        # "permutation" (swap halves) == pure variable rename; zero lane traffic
        za, zb = zb_new, za

    # standard-normal base log-density: one combined XLU reduce for both halves
    sq = jnp.sum(za * za + zb * zb, axis=-1, keepdims=True)          # (TB, 1)
    col = -0.5 * sq - 0.5 * float(ZDIM) * _LOG_2PI + logdet          # (TB, 1)

    # Lane-dense store: transpose the (TB, 1) column once so the writeback is
    # a dense row of TB lanes instead of a masked 1-lane-per-row store.
    logpz_ref[...] = jnp.transpose(col)[None]                        # (1, 1, TB)


# ------------------------------ wrapper --------------------------------------
def _pack_params(w1, b1, w2, b2, dtype):
    """One-time pack of per-layer params into a single lane-padded slab."""
    L = w1.shape[0]
    f32 = lambda a: a.astype(jnp.float32)
    w1z = f32(w1[:, :HALF, :])                                        # (L,16,64)
    w1y = f32(w1[:, HALF:, :])                                        # (L,16,64)
    b1p = jnp.zeros((L, _R_B1_PAD, HIDDEN), jnp.float32).at[:, 0:1, :].set(f32(b1))
    w2p = jnp.zeros((L, HIDDEN, HIDDEN), jnp.float32).at[:, :, :ZDIM].set(f32(w2))
    b2p = jnp.zeros((L, _R_B2_PAD, HIDDEN), jnp.float32).at[:, 0:1, :ZDIM].set(f32(b2))
    slab = jnp.concatenate([w1z, w1y, b1p, w2p, b2p], axis=1)         # (L,112,64)
    return slab.astype(dtype)


def _pick_batch_tile(B):
    """Largest multiple-of-8 tile <= 256 dividing B, preferring >=2 tiles (v7x)."""
    cands = [t for t in range(8, min(B, 256) + 1, 8) if B % t == 0]
    if not cands:
        return B                       # tiny / odd batch: one full-extent tile
    multi = [t for t in cands if B // t >= 2]
    return max(multi) if multi else max(cands)


def latent_flow_forward(y, z, params, *, tile_batch=None, input_dtype=jnp.float32):
    """Equivalent of LatentFlow.forward(..., val=True): returns (log_pz, prior_nats).

    input_dtype=jnp.bfloat16 halves HBM/DMA bytes for the batch-scaling arrays
    (useful on v6e/v7x at large batch); keep f32 on v5e.  In-kernel math is f32.
    """
    w1, b1, w2, b2 = params
    assert w1.shape[0] == N_LAYERS and y.shape[1] == Y_DIM and z.shape[1] == ZDIM
    B = y.shape[0]
    TB = _pick_batch_tile(B) if tile_batch is None else tile_batch
    assert B % TB == 0, "batch must be a multiple of the batch tile"
    n_tiles = B // TB

    # One-time XLA-side packs/casts.  z is passed whole; its half split is a
    # static in-kernel lane slice (no extra HBM copy of z).
    slab = _pack_params(w1, b1, w2, b2, input_dtype)
    y_in = y.astype(input_dtype)
    z_in = z.astype(input_dtype)

    batch_map = lambda i: (i, 0)
    out_map = lambda i: (i, 0, 0)
    slab_map = lambda i: (0, 0, 0)     # same block every step -> stays resident

    itemsize = jnp.dtype(input_dtype).itemsize
    flops = B * (N_LAYERS * 2 * HIDDEN * (HALF + Y_DIM + HIDDEN) + 10 * ZDIM)
    transcendentals = B * N_LAYERS * (HIDDEN + 2 * HALF)
    bytes_accessed = itemsize * (y_in.size + z_in.size + slab.size) + 4 * B

    out = pl.pallas_call(
        _latent_flow_logprob_kernel,
        out_shape=jax.ShapeDtypeStruct((n_tiles, 1, TB), jnp.float32),
        grid=(n_tiles,),
        in_specs=[
            pl.BlockSpec((TB, Y_DIM), batch_map),
            pl.BlockSpec((TB, ZDIM), batch_map),
            pl.BlockSpec(slab.shape, slab_map),
        ],
        out_specs=pl.BlockSpec((1, 1, TB), out_map),
        compiler_params=pltpu.CompilerParams(
            dimension_semantics=("parallel",)),
        cost_estimate=pl.CostEstimate(
            flops=flops, transcendentals=transcendentals,
            bytes_accessed=bytes_accessed),
    )(y_in, z_in, slab)

    log_pz = out.reshape(B, 1)
    # prior_nats = (-log_pz.mean()) / zdim  -- cross-tile mean done in XLA (free)
    prior_nats = -jnp.mean(log_pz) / float(ZDIM)
    return log_pz, prior_nats


# --------------------------- pure-JAX reference -------------------------------
def _reference_forward(y, z, params):
    w1, b1, w2, b2 = params
    z = z.astype(jnp.float32)
    ctx = y.astype(jnp.float32)
    logdet = jnp.zeros((z.shape[0], 1), jnp.float32)
    for k in range(N_LAYERS):
        z1, z2 = z[:, :HALF], z[:, HALF:]
        h = jnp.tanh(jnp.concatenate([z1, ctx], -1) @ w1[k] + b1[k])
        p = h @ w2[k] + b2[k]
        shift, log_scale = p[:, :HALF], jnp.tanh(p[:, HALF:])
        z2n = (z2 - shift) * jnp.exp(-log_scale)
        logdet = logdet - jnp.sum(log_scale, -1, keepdims=True)
        z = jnp.concatenate([z2n, z1], -1)
    log_base = -0.5 * z * z - 0.5 * _LOG_2PI
    log_pz = jnp.sum(log_base, -1, keepdims=True) + logdet
    prior_nats = -jnp.mean(log_pz) / float(ZDIM)
    return log_pz, prior_nats


# ------------------------------- main -----------------------------------------
if __name__ == "__main__":
    key = jax.random.PRNGKey(0)
    ky, kz, k1, k2, k3, k4 = jax.random.split(key, 6)

    # inputs:  y (context) and z (latent), matching forward(y, z, ...)
    y = jax.random.normal(ky, (BATCH, Y_DIM), dtype=jnp.float32)
    z = jax.random.normal(kz, (BATCH, ZDIM), dtype=jnp.float32)

    # deterministic synthetic flow parameters (joint layout, packed in wrapper)
    in_dim = HALF + Y_DIM
    w1 = 0.1 * jax.random.normal(k1, (N_LAYERS, in_dim, HIDDEN), dtype=jnp.float32)
    b1 = 0.01 * jax.random.normal(k2, (N_LAYERS, 1, HIDDEN), dtype=jnp.float32)
    w2 = 0.1 * jax.random.normal(k3, (N_LAYERS, HIDDEN, ZDIM), dtype=jnp.float32)
    b2 = 0.01 * jax.random.normal(k4, (N_LAYERS, 1, ZDIM), dtype=jnp.float32)
    params = (w1, b1, w2, b2)

    ref_log_pz, ref_nats = _reference_forward(y, z, params)

    # f32 path (v5e default)
    log_pz, prior_nats = latent_flow_forward(y, z, params)
    jax.block_until_ready((log_pz, prior_nats))
    assert jnp.allclose(log_pz, ref_log_pz, atol=2e-3, rtol=2e-4), "log_pz mismatch"
    assert jnp.allclose(prior_nats, ref_nats, atol=1e-4, rtol=1e-4), "prior_nats mismatch"

    # bf16-input path (v6e/v7x memory-bound batches); in-kernel math stays f32.
    log_pz_bf16, nats_bf16 = latent_flow_forward(y, z, params,
                                                 input_dtype=jnp.bfloat16)
    jax.block_until_ready((log_pz_bf16, nats_bf16))
    assert jnp.allclose(log_pz_bf16, ref_log_pz, atol=1.0, rtol=5e-2), "bf16 log_pz mismatch"
    assert jnp.allclose(nats_bf16, ref_nats, atol=5e-2, rtol=5e-2), "bf16 prior_nats mismatch"

    print("KERNEL_OK")
</pallas_src>

<mosaic_0001>
module attributes {stable_mosaic.version = 11 : i64} {
  func.func @_latent_flow_logprob_kernel(%arg0: i32, %arg1: memref<16x16xf32, #tpu.memory_space<vmem>>, %arg2: memref<16x32xf32, #tpu.memory_space<vmem>>, %arg3: memref<2x112x64xf32, #tpu.memory_space<vmem>>, %arg4: memref<1x1x16xf32, #tpu.memory_space<vmem>>) attributes {dimension_semantics = [#tpu.dimension_semantics<parallel>], iteration_bounds = array<i64: 2>, scalar_prefetch = 0 : i64, scratch_operands = 0 : i64, tpu.core_type = #tpu.core_type<tc>, window_params = [{transform_indices = @transform_0, window_bounds = array<i64: 16, 16>}, {transform_indices = @transform_1, window_bounds = array<i64: 16, 32>}, {pipeline_mode = #tpu.pipeline_mode<synchronous>, transform_indices = @transform_2, window_bounds = array<i64: 2, 112, 64>}, {transform_indices = @transform_3, window_bounds = array<i64: 1, 1, 16>}]} {
    %c0 = arith.constant 0 : index
    %c0_0 = arith.constant 0 : index
    %0 = vector.load %arg1[%c0, %c0_0] : memref<16x16xf32, #tpu.memory_space<vmem>>, vector<16x16xf32>
    %c0_1 = arith.constant 0 : index
    %c0_2 = arith.constant 0 : index
    %1 = vector.load %arg2[%c0_1, %c0_2] : memref<16x32xf32, #tpu.memory_space<vmem>>, vector<16x32xf32>
    %2 = vector.extract_strided_slice %1 {offsets = [0, 0], sizes = [16, 16], strides = [1, 1]} : vector<16x32xf32> to vector<16x16xf32>
    %3 = vector.extract_strided_slice %1 {offsets = [0, 16], sizes = [16, 16], strides = [1, 1]} : vector<16x32xf32> to vector<16x16xf32>
    %cst = arith.constant 0.000000e+00 : f32
    %4 = vector.broadcast %cst : f32 to vector<16x1xf32>
    %c0_3 = arith.constant 0 : index
    %c0_4 = arith.constant 0 : index
    %c0_5 = arith.constant 0 : index
    %5 = vector.load %arg3[%c0_3, %c0_4, %c0_5] : memref<2x112x64xf32, #tpu.memory_space<vmem>>, vector<1x16x64xf32>
    %6 = vector.shape_cast %5 : vector<1x16x64xf32> to vector<16x64xf32>
    %c0_6 = arith.constant 0 : index
    %c16 = arith.constant 16 : index
    %c0_7 = arith.constant 0 : index
    %7 = vector.load %arg3[%c0_6, %c16, %c0_7] : memref<2x112x64xf32, #tpu.memory_space<vmem>>, vector<1x16x64xf32>
    %8 = vector.shape_cast %7 : vector<1x16x64xf32> to vector<16x64xf32>
    %c0_8 = arith.constant 0 : index
    %c32 = arith.constant 32 : index
    %c0_9 = arith.constant 0 : index
    %9 = vector.load %arg3[%c0_8, %c32, %c0_9] : memref<2x112x64xf32, #tpu.memory_space<vmem>>, vector<1x1x64xf32>
    %10 = vector.shape_cast %9 : vector<1x1x64xf32> to vector<1x64xf32>
    %c0_10 = arith.constant 0 : index
    %c40 = arith.constant 40 : index
    %c0_11 = arith.constant 0 : index
    %11 = vector.load %arg3[%c0_10, %c40, %c0_11] : memref<2x112x64xf32, #tpu.memory_space<vmem>>, vector<1x64x64xf32>
    %12 = vector.shape_cast %11 : vector<1x64x64xf32> to vector<64x64xf32>
    %c0_12 = arith.constant 0 : index
    %c104 = arith.constant 104 : index
    %c0_13 = arith.constant 0 : index
    %13 = vector.load %arg3[%c0_12, %c104, %c0_13] : memref<2x112x64xf32, #tpu.memory_space<vmem>>, vector<1x1x64xf32>
    %14 = vector.shape_cast %13 : vector<1x1x64xf32> to vector<1x64xf32>
    %cst_14 = arith.constant dense<0.000000e+00> : vector<16x64xf32>
    %15 = tpu.matmul %2, %6, %cst_14 {dimension_numbers = #tpu.dot_dimension_numbers<[1], [0], [0], [1], [0, 0, 1, 1], [], []>} : vector<16x16xf32>, vector<16x64xf32>, vector<16x64xf32> -> vector<16x64xf32>
    %cst_15 = arith.constant dense<0.000000e+00> : vector<16x64xf32>
    %16 = tpu.matmul %0, %8, %cst_15 {dimension_numbers = #tpu.dot_dimension_numbers<[1], [0], [0], [1], [0, 0, 1, 1], [], []>} : vector<16x16xf32>, vector<16x64xf32>, vector<16x64xf32> -> vector<16x64xf32>
    %17 = arith.addf %15, %16 : vector<16x64xf32>
    %18 = vector.broadcast %10 : vector<1x64xf32> to vector<16x64xf32>
    %19 = arith.addf %17, %18 : vector<16x64xf32>
    %20 = math.tanh %19 : vector<16x64xf32>
    %cst_16 = arith.constant dense<0.000000e+00> : vector<16x64xf32>
    %21 = tpu.matmul %20, %12, %cst_16 {dimension_numbers = #tpu.dot_dimension_numbers<[1], [0], [0], [1], [0, 0, 1, 1], [], []>} : vector<16x64xf32>, vector<64x64xf32>, vector<16x64xf32> -> vector<16x64xf32>
    %22 = vector.broadcast %14 : vector<1x64xf32> to vector<16x64xf32>
    %23 = arith.addf %21, %22 : vector<16x64xf32>
    %24 = vector.extract_strided_slice %23 {offsets = [0, 0], sizes = [16, 16], strides = [1, 1]} : vector<16x64xf32> to vector<16x16xf32>
    %25 = vector.extract_strided_slice %23 {offsets = [0, 16], sizes = [16, 16], strides = [1, 1]} : vector<16x64xf32> to vector<16x16xf32>
    %26 = math.tanh %25 : vector<16x16xf32>
    %27 = arith.subf %3, %24 : vector<16x16xf32>
    %cst_17 = arith.constant 0.000000e+00 : f32
    %28 = vector.broadcast %cst_17 : f32 to vector<16x16xf32>
    %29 = arith.subf %28, %26 : vector<16x16xf32>
    %30 = math.exp %29 : vector<16x16xf32>
    %31 = arith.mulf %27, %30 : vector<16x16xf32>
    %cst_18 = arith.constant dense<0.000000e+00> : vector<16xf32>
    %32 = vector.multi_reduction <add>, %26, %cst_18 [1] : vector<16x16xf32> to vector<16xf32>
    %33 = vector.shape_cast %32 : vector<16xf32> to vector<16x1xf32>
    %34 = arith.subf %4, %33 : vector<16x1xf32>
    %c1 = arith.constant 1 : index
    %c0_19 = arith.constant 0 : index
    %c0_20 = arith.constant 0 : index
    %35 = vector.load %arg3[%c1, %c0_19, %c0_20] : memref<2x112x64xf32, #tpu.memory_space<vmem>>, vector<1x16x64xf32>
    %36 = vector.shape_cast %35 : vector<1x16x64xf32> to vector<16x64xf32>
    %c1_21 = arith.constant 1 : index
    %c16_22 = arith.constant 16 : index
    %c0_23 = arith.constant 0 : index
    %37 = vector.load %arg3[%c1_21, %c16_22, %c0_23] : memref<2x112x64xf32, #tpu.memory_space<vmem>>, vector<1x16x64xf32>
    %38 = vector.shape_cast %37 : vector<1x16x64xf32> to vector<16x64xf32>
    %c1_24 = arith.constant 1 : index
    %c32_25 = arith.constant 32 : index
    %c0_26 = arith.constant 0 : index
    %39 = vector.load %arg3[%c1_24, %c32_25, %c0_26] : memref<2x112x64xf32, #tpu.memory_space<vmem>>, vector<1x1x64xf32>
    %40 = vector.shape_cast %39 : vector<1x1x64xf32> to vector<1x64xf32>
    %c1_27 = arith.constant 1 : index
    %c40_28 = arith.constant 40 : index
    %c0_29 = arith.constant 0 : index
    %41 = vector.load %arg3[%c1_27, %c40_28, %c0_29] : memref<2x112x64xf32, #tpu.memory_space<vmem>>, vector<1x64x64xf32>
    %42 = vector.shape_cast %41 : vector<1x64x64xf32> to vector<64x64xf32>
    %c1_30 = arith.constant 1 : index
    %c104_31 = arith.constant 104 : index
    %c0_32 = arith.constant 0 : index
    %43 = vector.load %arg3[%c1_30, %c104_31, %c0_32] : memref<2x112x64xf32, #tpu.memory_space<vmem>>, vector<1x1x64xf32>
    %44 = vector.shape_cast %43 : vector<1x1x64xf32> to vector<1x64xf32>
    %cst_33 = arith.constant dense<0.000000e+00> : vector<16x64xf32>
    %45 = tpu.matmul %31, %36, %cst_33 {dimension_numbers = #tpu.dot_dimension_numbers<[1], [0], [0], [1], [0, 0, 1, 1], [], []>} : vector<16x16xf32>, vector<16x64xf32>, vector<16x64xf32> -> vector<16x64xf32>
    %cst_34 = arith.constant dense<0.000000e+00> : vector<16x64xf32>
    %46 = tpu.matmul %0, %38, %cst_34 {dimension_numbers = #tpu.dot_dimension_numbers<[1], [0], [0], [1], [0, 0, 1, 1], [], []>} : vector<16x16xf32>, vector<16x64xf32>, vector<16x64xf32> -> vector<16x64xf32>
    %47 = arith.addf %45, %46 : vector<16x64xf32>
    %48 = vector.broadcast %40 : vector<1x64xf32> to vector<16x64xf32>
    %49 = arith.addf %47, %48 : vector<16x64xf32>
    %50 = math.tanh %49 : vector<16x64xf32>
    %cst_35 = arith.constant dense<0.000000e+00> : vector<16x64xf32>
    %51 = tpu.matmul %50, %42, %cst_35 {dimension_numbers = #tpu.dot_dimension_numbers<[1], [0], [0], [1], [0, 0, 1, 1], [], []>} : vector<16x64xf32>, vector<64x64xf32>, vector<16x64xf32> -> vector<16x64xf32>
    %52 = vector.broadcast %44 : vector<1x64xf32> to vector<16x64xf32>
    %53 = arith.addf %51, %52 : vector<16x64xf32>
    %54 = vector.extract_strided_slice %53 {offsets = [0, 0], sizes = [16, 16], strides = [1, 1]} : vector<16x64xf32> to vector<16x16xf32>
    %55 = vector.extract_strided_slice %53 {offsets = [0, 16], sizes = [16, 16], strides = [1, 1]} : vector<16x64xf32> to vector<16x16xf32>
    %56 = math.tanh %55 : vector<16x16xf32>
    %57 = arith.subf %2, %54 : vector<16x16xf32>
    %cst_36 = arith.constant 0.000000e+00 : f32
    %58 = vector.broadcast %cst_36 : f32 to vector<16x16xf32>
    %59 = arith.subf %58, %56 : vector<16x16xf32>
    %60 = math.exp %59 : vector<16x16xf32>
    %61 = arith.mulf %57, %60 : vector<16x16xf32>
    %cst_37 = arith.constant dense<0.000000e+00> : vector<16xf32>
    %62 = vector.multi_reduction <add>, %56, %cst_37 [1] : vector<16x16xf32> to vector<16xf32>
    %63 = vector.shape_cast %62 : vector<16xf32> to vector<16x1xf32>
    %64 = arith.subf %34, %63 : vector<16x1xf32>
    %65 = arith.mulf %61, %61 : vector<16x16xf32>
    %66 = arith.mulf %31, %31 : vector<16x16xf32>
    %67 = arith.addf %65, %66 : vector<16x16xf32>
    %cst_38 = arith.constant dense<0.000000e+00> : vector<16xf32>
    %68 = vector.multi_reduction <add>, %67, %cst_38 [1] : vector<16x16xf32> to vector<16xf32>
    %69 = vector.shape_cast %68 : vector<16xf32> to vector<16x1xf32>
    %cst_39 = arith.constant -5.000000e-01 : f32
    %70 = vector.broadcast %cst_39 : f32 to vector<16x1xf32>
    %71 = arith.mulf %70, %69 : vector<16x1xf32>
    %cst_40 = arith.constant 29.4060326 : f32
    %72 = vector.broadcast %cst_40 : f32 to vector<16x1xf32>
    %73 = arith.subf %71, %72 : vector<16x1xf32>
    %74 = arith.addf %73, %64 : vector<16x1xf32>
    %75 = tpu.transpose %74, [1, 0] : vector<16x1xf32> -> vector<1x16xf32>
    %76 = vector.shape_cast %75 : vector<1x16xf32> to vector<1x1x16xf32>
    %c0_41 = arith.constant 0 : index
    %c0_42 = arith.constant 0 : index
    %c0_43 = arith.constant 0 : index
    %77 = vector.load %arg4[%c0_41, %c0_42, %c0_43] : memref<1x1x16xf32, #tpu.memory_space<vmem>>, vector<1x1x16xf32>
    tpu.vector_store %arg4[%c0_41, %c0_42, %c0_43], %76 {strides = array<i32>} : memref<1x1x16xf32, #tpu.memory_space<vmem>>, vector<1x1x16xf32>,
    return
  }
  func.func @transform_0(%arg0: i32) -> (i32, i32) {
    %c0_i32 = arith.constant 0 : i32
    %c0_i32_0 = arith.constant 0 : i32
    return %arg0, %c0_i32 : i32, i32
  }
  func.func @transform_1(%arg0: i32) -> (i32, i32) {
    %c0_i32 = arith.constant 0 : i32
    %c0_i32_0 = arith.constant 0 : i32
    return %arg0, %c0_i32 : i32, i32
  }
  func.func @transform_2(%arg0: i32) -> (i32, i32, i32) {
    %c0_i32 = arith.constant 0 : i32
    %c0_i32_0 = arith.constant 0 : i32
    %c0_i32_1 = arith.constant 0 : i32
    %c0_i32_2 = arith.constant 0 : i32
    return %c0_i32, %c0_i32_0, %c0_i32_1 : i32, i32, i32
  }
  func.func @transform_3(%arg0: i32) -> (i32, i32, i32) {
    %c0_i32 = arith.constant 0 : i32
    %c0_i32_0 = arith.constant 0 : i32
    %c0_i32_1 = arith.constant 0 : i32
    return %arg0, %c0_i32, %c0_i32_0 : i32, i32, i32
  }
}

</mosaic_0001>

<llo_original>
// kernel: tpu_custom_call.1
$region0: #{tpu_custom_call.1}
  #allocation0 [shape = 'u32[]', space=smem, size = 0x4, offset = 0x4, fixed_abs, tag = 'smem constant byte address 0x4 - core index']
  #allocation1 [shape = 'u32[144,128]{1,0:T(1,128)}', space=vmem, size = 0x12000, scoped, tag = 'internal scratch']
  %s0 = inlined_call_operand.vmem [shape: f32[32,16], index: 0, kind: input, shape index: {}]
  %s1 = inlined_call_operand.vmem [shape: f32[32,32], index: 1, kind: input, shape index: {}]
  %s2 = inlined_call_operand.vmem [shape: f32[2,112,64], index: 2, kind: input, shape index: {}]
  %s3 = inlined_call_operand.hbm [shape: f32[2,1,16], index: 3, kind: output, shape index: {}]
  %s4 = sld [smem:[#allocation0]]
  $region45: #{tpu_custom_call.1} parent=0
    _
  %s6 = ssub.s32 1, %s4
  %s7 = scalar_select 0, %s6, %s4
  $region1: #{tpu_custom_call.1} parent=0
    #allocation2 [shape = 'u8[1024]{0}', space=vmem, size = 0x400, scoped, tag = 'output window, operand 0']
    #allocation3 [shape = 's32[2]{0}', space=sflag, size = 0x8, scoped, tag = 'scoped memory for tpu_custom_call.1']
    %8 = vsyncpa [#allocation3], 0
    %s9 = scalar_lea.sflag [#allocation3], 1
    %10 = vsyncpa %s9, 0
    loop: start=0, step=1, limit=4
    $region2: #{tpu_custom_call.1} parent=1 // loop_pre_header
      _
    $region3: #{tpu_custom_call.1} parent=1 // loop_header
      %s12 = sphi 0, %s16
      %p13 = scmp.ge.s32.totalorder %s12, 4
      %s22 = sphi 0, %s24
      %s25 = sphi 0, %s22
      %s26 = sphi 0, %s25
      %s42 = sphi 0, %s26
      %s48 = sphi 0, %s50
      %s51 = sphi 0, %s48
      %s52 = sphi 0, %s51
      %s68 = sphi 0, %s52
      %s72 = sphi 0, %s72
      %s74 = sphi 0, %s72
      %s75 = sphi 0, %s74
      %s89 = sphi 0, %s75
      %s95 = sphi 0, %s97
      %s98 = sphi 0, %s95
      %s99 = sphi 0, %s98
      %s115 = sphi 0, %s99
    $region4: #{tpu_custom_call.1} parent=1 // loop_header_branch
      %15 = sbr.rel (%p13) target = $region8
    $region5: #{tpu_custom_call.1} parent=1 // loop_body
      %s17 = ssub.s32 %s12, 1
      %s18 = ssub.s32 %s12, 2
      %s19 = sadd.s32 %s12, 1
      %s20 = ssub.s32 %s12, %s19
      %p21 = scmp.eq.s32.totalorder %s20, 0
      %s23 = sadd.s32 %s22, 1
      %s24 = scalar_select %p21, %s22, %s23
      %p27 = pneg %p21
      %p28 = scmp.eq.s32.totalorder %s12, 1
      %p29 = por %p27, %p28
      %p30 = scmp.ne.s32.totalorder %s22, %s25
      %p31 = scmp.eq.s32.totalorder %s12, 0
      %p32 = por %p30, %p31
      %p33 = scmp.ne.s32.totalorder %s22, %s25
      %p34 = scmp.eq.s32.totalorder %s17, 1
      %p35 = por %p33, %p34
      %p36 = scmp.ne.s32.totalorder %s25, %s26
      %p37 = scmp.eq.s32.totalorder %s17, 0
      %p38 = por %p36, %p37
      %p39 = scmp.ne.s32.totalorder %s25, %s26
      %p40 = scmp.eq.s32.totalorder %s18, 1
      %p41 = por %p39, %p40
      %p43 = scmp.ne.s32.totalorder %s26, %s42
      %p44 = scmp.eq.s32.totalorder %s18, 0
      %p45 = por %p43, %p44
      %s46 = ssub.s32 %s12, %s19
      %p47 = scmp.eq.s32.totalorder %s46, 0
      %s49 = sadd.s32 %s48, 1
      %s50 = scalar_select %p47, %s48, %s49
      %p53 = pneg %p47
      %p54 = scmp.eq.s32.totalorder %s12, 1
      %p55 = por %p53, %p54
      %p56 = scmp.ne.s32.totalorder %s48, %s51
      %p57 = scmp.eq.s32.totalorder %s12, 0
      %p58 = por %p56, %p57
      %p59 = scmp.ne.s32.totalorder %s48, %s51
      %p60 = scmp.eq.s32.totalorder %s17, 1
      %p61 = por %p59, %p60
      %p62 = scmp.ne.s32.totalorder %s51, %s52
      %p63 = scmp.eq.s32.totalorder %s17, 0
      %p64 = por %p62, %p63
      %p65 = scmp.ne.s32.totalorder %s51, %s52
      %p66 = scmp.eq.s32.totalorder %s18, 1
      %p67 = por %p65, %p66
      %p69 = scmp.ne.s32.totalorder %s52, %s68
      %p70 = scmp.eq.s32.totalorder %s18, 0
      %p71 = por %p69, %p70
      %s73 = sadd.s32 %s72, 1
      %p76 = scmp.eq.s32.totalorder %s12, 1
      %p77 = scmp.ne.s32.totalorder %s72, %s74
      %p78 = scmp.eq.s32.totalorder %s12, 0
      %p79 = por %p77, %p78
      %p80 = scmp.ne.s32.totalorder %s72, %s74
      %p81 = scmp.eq.s32.totalorder %s17, 1
      %p82 = por %p80, %p81
      %p83 = scmp.ne.s32.totalorder %s74, %s75
      %p84 = scmp.eq.s32.totalorder %s17, 0
      %p85 = por %p83, %p84
      %p86 = scmp.ne.s32.totalorder %s74, %s75
      %p87 = scmp.eq.s32.totalorder %s18, 1
      %p88 = por %p86, %p87
      %p90 = scmp.ne.s32.totalorder %s75, %s89
      %p91 = scmp.eq.s32.totalorder %s18, 0
      %p92 = por %p90, %p91
      %s93 = ssub.s32 %s12, %s19
      %p94 = scmp.eq.s32.totalorder %s93, 0
      %s96 = sadd.s32 %s95, 1
      %s97 = scalar_select %p94, %s95, %s96
      %p100 = pneg %p94
      %p101 = scmp.eq.s32.totalorder %s12, 1
      %p102 = por %p100, %p101
      %p103 = scmp.ne.s32.totalorder %s95, %s98
      %p104 = scmp.eq.s32.totalorder %s12, 0
      %p105 = por %p103, %p104
      %p106 = scmp.ne.s32.totalorder %s95, %s98
      %p107 = scmp.eq.s32.totalorder %s17, 1
      %p108 = por %p106, %p107
      %p109 = scmp.ne.s32.totalorder %s98, %s99
      %p110 = scmp.eq.s32.totalorder %s17, 0
      %p111 = por %p109, %p110
      %p112 = scmp.ne.s32.totalorder %s98, %s99
      %p113 = scmp.eq.s32.totalorder %s18, 1
      %p114 = por %p112, %p113
      %p116 = scmp.ne.s32.totalorder %s99, %s115
      %p117 = scmp.eq.s32.totalorder %s18, 0
      %p118 = por %p116, %p117
      %p119 = scmp.le.s32.totalorder 1, %s12
      %p120 = scmp.lt.s32.totalorder %s12, 3
      %p121 = pnand %p119, %p120
      %p122 = pneg %p121
      // Predicated region
      $region9: #{tpu_custom_call.1} parent=5 // pred_check
        _
      $region10: #{tpu_custom_call.1} parent=5 // pred_check_branch
        %124 = sbr.rel (%p121) target = $region12
      $region11: #{tpu_custom_call.1} parent=5 // pred_region
        %s125 = ssub.s32 %s12, 1
        // Predicated region
        $region13: #{tpu_custom_call.1} parent=11 // pred_check
          %p126 = pneg %p85
        $region14: #{tpu_custom_call.1} parent=11 // pred_check_branch
          %128 = sbr.rel (%p126) target = $region16
        $region15: #{tpu_custom_call.1} parent=11 // pred_region
          _
        $region16: #{tpu_custom_call.1} parent=11 // pred_fallthru
          _
      $region12: #{tpu_custom_call.1} parent=5 // pred_fallthru
        _
      %p129 = scmp.lt.s32.totalorder %s12, 2
      // Predicated region
      $region17: #{tpu_custom_call.1} parent=5 // pred_check
        %p130 = pneg %p129
      $region18: #{tpu_custom_call.1} parent=5 // pred_check_branch
        %132 = sbr.rel (%p130) target = $region20
      $region19: #{tpu_custom_call.1} parent=5 // pred_region
        // Predicated region
        $region21: #{tpu_custom_call.1} parent=19 // pred_check
          %p133 = pneg %p32
        $region22: #{tpu_custom_call.1} parent=19 // pred_check_branch
          %135 = sbr.rel (%p133) target = $region24
        $region23: #{tpu_custom_call.1} parent=19 // pred_region
          %s136 = smul.u32 2, %s12
          %p137 = scmp.lt.s32.totalorder %s136, 3
          %s138 = scalar_select %p137, %s136, 3
          %s139 = smul.addr %s138, 8
          %s140 = scalar_lea.vmem %s0, %s139
          %s141 = smul.u32 2, %s12
        $region24: #{tpu_custom_call.1} parent=19 // pred_fallthru
          _
        // Predicated region
        $region25: #{tpu_custom_call.1} parent=19 // pred_check
          %p142 = pneg %p58
        $region26: #{tpu_custom_call.1} parent=19 // pred_check_branch
          %144 = sbr.rel (%p142) target = $region28
        $region27: #{tpu_custom_call.1} parent=19 // pred_region
          %s145 = smul.u32 2, %s12
          %p146 = scmp.lt.s32.totalorder %s145, 3
          %s147 = scalar_select %p146, %s145, 3
          %s148 = smul.addr %s147, 8
          %s149 = scalar_lea.vmem %s1, %s148
          %s150 = smul.u32 2, %s12
        $region28: #{tpu_custom_call.1} parent=19 // pred_fallthru
          _
      $region20: #{tpu_custom_call.1} parent=5 // pred_fallthru
        _
      %p151 = scmp.le.s32.totalorder 1, %s12
      %p152 = scmp.lt.s32.totalorder %s12, 3
      %p153 = pnand %p151, %p152
      %p154 = pneg %p153
      // Predicated region
      $region29: #{tpu_custom_call.1} parent=5 // pred_check
        _
      $region30: #{tpu_custom_call.1} parent=5 // pred_check_branch
        %156 = sbr.rel (%p153) target = $region32
      $region31: #{tpu_custom_call.1} parent=5 // pred_region
        %s157 = ssub.s32 %s12, 1
        %s158 = smul.u32 2, %s17
        %p159 = scmp.lt.s32.totalorder %s158, 3
        %s160 = scalar_select %p159, %s158, 3
        %s161 = smul.addr %s160, 8
        %s162 = scalar_lea.vmem %s0, %s161
        %p163 = pneg %p38
        %p164 = pneg %p35
        %s165 = smul.u32 2, %s17
        %p166 = scmp.lt.s32.totalorder %s165, 3
        %s167 = scalar_select %p166, %s165, 3
        %s168 = smul.addr %s167, 8
        %s169 = scalar_lea.vmem %s1, %s168
        %p170 = pneg %p64
        %p171 = pneg %p61
        %p172 = pneg %p85
        %p173 = pneg %p82
        %p174 = pneg %p111
        %p175 = pneg %p108
        %s176 = sand.u32 %s98, 1
        %s177 = scalar_lea.sflag [#allocation3], %s176
        %s178 = sand.u32 %s98, 1
        %s179 = scalar_lea.vmem [#allocation2], %s178
        %s180 = smul.u32 2, %s17
        %p181 = scmp.lt.s32.totalorder %s180, 3
        %s182 = scalar_select %p181, %s180, 3
        %s183 = smul.addr %s182, 8
        %s184 = scalar_lea.vmem %s0, %s183
        %s185 = smul.u32 2, %s17
        %s186 = smul.u32 2, %s17
        %p187 = scmp.lt.s32.totalorder %s186, 3
        %s188 = scalar_select %p187, %s186, 3
        %s189 = smul.addr %s188, 8
        %s190 = scalar_lea.vmem %s1, %s189
        %s191 = smul.u32 2, %s17
        %v192 = vld [vmem:[%s184] sm:$0xff]
        %v193 = vld [vmem:[%s184 + $0x8] sm:$0xff]
        %v194 = vld [vmem:[%s190] sm:$0xff]
        %v195 = vld [vmem:[%s190 + $0x8] sm:$0xff]
        %v196 = vld [vmem:[%s2] sm:$0xff]
        %v197 = vld [vmem:[%s2 + $0x8] sm:$0xff]
        %v198 = vld [vmem:[%s2 + $0x10] sm:$0xff]
        %v199 = vld [vmem:[%s2 + $0x18] sm:$0xff]
        %v200 = vld [vmem:[%s2 + $0x20] sm:$0x1]
        %v201 = vld [vmem:[%s2 + $0x28] sm:$0xff]
        %v202 = vld [vmem:[%s2 + $0x30] sm:$0xff]
        %v203 = vld [vmem:[%s2 + $0x38] sm:$0xff]
        %v204 = vld [vmem:[%s2 + $0x40] sm:$0xff]
        %v205 = vld [vmem:[%s2 + $0x48] sm:$0xff]
        %v206 = vld [vmem:[%s2 + $0x50] sm:$0xff]
        %v207 = vld [vmem:[%s2 + $0x58] sm:$0xff]
        %v208 = vld [vmem:[%s2 + $0x60] sm:$0xff]
        %v209 = vld [vmem:[%s2 + $0x68] sm:$0x1]
        %vm210 = vcmask 130048
        %v212 = vsel %vm210, %v192, 0
        %v215 = vsel %vm210, %v193, 0
        %217 = vmatprep.subr.mxu0 0.0
        %218 = vmatpush1.msra.mxu0 0.0
        %219 = vmatprep.subr.mxu0 0.0
        %220 = vmatpush1.msra.mxu0 0.0
        %221 = vmatprep.subr.mxu0 0.0
        %222 = vmatpush1.msra.mxu0 0.0
        %223 = vmatprep.subr.mxu0 0.0
        %224 = vmatpush1.msra.mxu0 0.0
        %225 = vmatprep.subr.mxu0 0.0
        %226 = vmatpush1.msra.mxu0 0.0
        %227 = vmatprep.subr.mxu0 0.0
        %228 = vmatpush1.msra.mxu0 0.0
        %229 = vmatprep.subr.mxu0 0.0
        %230 = vmatpush1.msra.mxu0 0.0
        %231 = vmatprep.subr.mxu0 0.0
        %232 = vmatpush1.msra.mxu0 0.0
        %233 = vmatprep.subr.mxu0 0.0
        %234 = vmatpush1.msra.mxu0 0.0
        %235 = vmatprep.subr.mxu0 0.0
        %236 = vmatpush1.msra.mxu0 0.0
        %237 = vmatprep.subr.mxu0 0.0
        %238 = vmatpush1.msra.mxu0 0.0
        %239 = vmatprep.subr.mxu0 0.0
        %240 = vmatpush1.msra.mxu0 0.0
        %241 = vmatprep.subr.mxu0 0.0
        %242 = vmatpush1.msra.mxu0 0.0
        %243 = vmatprep.subr.mxu0 0.0
        %244 = vmatpush1.msra.mxu0 0.0
        %245 = vmatprep.subr.mxu0 0.0
        %246 = vmatpush1.msra.mxu0 %v199
        %247 = vmatprep.subr.mxu0 0.0
        %248 = vmatpush1.msra.mxu0 %v198
        %249 = vmatprep.subr.mxu0 0.0
        %250 = vmatpush2.msra.mxu0 0.0
        %251 = vmatprep.subr.mxu0 0.0
        %252 = vmatpush2.msra.mxu0 0.0
        %253 = vmatprep.subr.mxu0 0.0
        %254 = vmatpush2.msra.mxu0 0.0
        %255 = vmatprep.subr.mxu0 0.0
        %256 = vmatpush2.msra.mxu0 0.0
        %257 = vmatprep.subr.mxu0 0.0
        %258 = vmatpush2.msra.mxu0 0.0
        %259 = vmatprep.subr.mxu0 0.0
        %260 = vmatpush2.msra.mxu0 0.0
        %261 = vmatprep.subr.mxu0 0.0
        %262 = vmatpush2.msra.mxu0 0.0
        %263 = vmatprep.subr.mxu0 0.0
        %264 = vmatpush2.msra.mxu0 0.0
        %265 = vmatprep.subr.mxu0 0.0
        %266 = vmatpush2.msra.mxu0 0.0
        %267 = vmatprep.subr.mxu0 0.0
        %268 = vmatpush2.msra.mxu0 0.0
        %269 = vmatprep.subr.mxu0 0.0
        %270 = vmatpush2.msra.mxu0 0.0
        %271 = vmatprep.subr.mxu0 0.0
        %272 = vmatpush2.msra.mxu0 0.0
        %273 = vmatprep.subr.mxu0 0.0
        %274 = vmatpush2.msra.mxu0 0.0
        %275 = vmatprep.subr.mxu0 0.0
        %276 = vmatpush2.msra.mxu0 0.0
        %277 = vmatprep.subr.mxu0 0.0
        %278 = vmatpush2.msra.mxu0 0.0
        %279 = vmatprep.subr.mxu0 0.0
        %280 = vmatpush2.msra.mxu0 0.0
        %281 = vmatprep.mubr.f32.mxu0 0.0
        %282 = vmatmul.mubr.f32.gmra.mxu0 %v212
        %v283 = vpop.f32.mrf.mxu0
        %v284 = vadd.f32 0.0, %v283
        %v285 = vpop.f32.mrf.mxu0
        %286 = vmatprep.mubr.f32.mxu0 0.0
        %287 = vmatmul.mubr.f32.gmra.mxu0 %v215
        %v288 = vpop.f32.mrf.mxu0
        %v289 = vadd.f32 0.0, %v288
        %v290 = vpop.f32.mrf.mxu0
        %291 = vdwg.mxu0
        %v293 = vsel %vm210, %v194, 0
        %v296 = vsel %vm210, %v195, 0
        %298 = vmatprep.subr.mxu0 0.0
        %299 = vmatpush1.msra.mxu0 0.0
        %300 = vmatprep.subr.mxu0 0.0
        %301 = vmatpush1.msra.mxu0 0.0
        %302 = vmatprep.subr.mxu0 0.0
        %303 = vmatpush1.msra.mxu0 0.0
        %304 = vmatprep.subr.mxu0 0.0
        %305 = vmatpush1.msra.mxu0 0.0
        %306 = vmatprep.subr.mxu0 0.0
        %307 = vmatpush1.msra.mxu0 0.0
        %308 = vmatprep.subr.mxu0 0.0
        %309 = vmatpush1.msra.mxu0 0.0
        %310 = vmatprep.subr.mxu0 0.0
        %311 = vmatpush1.msra.mxu0 0.0
        %312 = vmatprep.subr.mxu0 0.0
        %313 = vmatpush1.msra.mxu0 0.0
        %314 = vmatprep.subr.mxu0 0.0
        %315 = vmatpush1.msra.mxu0 0.0
        %316 = vmatprep.subr.mxu0 0.0
        %317 = vmatpush1.msra.mxu0 0.0
        %318 = vmatprep.subr.mxu0 0.0
        %319 = vmatpush1.msra.mxu0 0.0
        %320 = vmatprep.subr.mxu0 0.0
        %321 = vmatpush1.msra.mxu0 0.0
        %322 = vmatprep.subr.mxu0 0.0
        %323 = vmatpush1.msra.mxu0 0.0
        %324 = vmatprep.subr.mxu0 0.0
        %325 = vmatpush1.msra.mxu0 0.0
        %326 = vmatprep.subr.mxu0 0.0
        %327 = vmatpush1.msra.mxu0 %v197
        %328 = vmatprep.subr.mxu0 0.0
        %329 = vmatpush1.msra.mxu0 %v196
        %330 = vmatprep.subr.mxu0 0.0
        %331 = vmatpush2.msra.mxu0 0.0
        %332 = vmatprep.subr.mxu0 0.0
        %333 = vmatpush2.msra.mxu0 0.0
        %334 = vmatprep.subr.mxu0 0.0
        %335 = vmatpush2.msra.mxu0 0.0
        %336 = vmatprep.subr.mxu0 0.0
        %337 = vmatpush2.msra.mxu0 0.0
        %338 = vmatprep.subr.mxu0 0.0
        %339 = vmatpush2.msra.mxu0 0.0
        %340 = vmatprep.subr.mxu0 0.0
        %341 = vmatpush2.msra.mxu0 0.0
        %342 = vmatprep.subr.mxu0 0.0
        %343 = vmatpush2.msra.mxu0 0.0
        %344 = vmatprep.subr.mxu0 0.0
        %345 = vmatpush2.msra.mxu0 0.0
        %346 = vmatprep.subr.mxu0 0.0
        %347 = vmatpush2.msra.mxu0 0.0
        %348 = vmatprep.subr.mxu0 0.0
        %349 = vmatpush2.msra.mxu0 0.0
        %350 = vmatprep.subr.mxu0 0.0
        %351 = vmatpush2.msra.mxu0 0.0
        %352 = vmatprep.subr.mxu0 0.0
        %353 = vmatpush2.msra.mxu0 0.0
        %354 = vmatprep.subr.mxu0 0.0
        %355 = vmatpush2.msra.mxu0 0.0
        %356 = vmatprep.subr.mxu0 0.0
        %357 = vmatpush2.msra.mxu0 0.0
        %358 = vmatprep.subr.mxu0 0.0
        %359 = vmatpush2.msra.mxu0 0.0
        %360 = vmatprep.subr.mxu0 0.0
        %361 = vmatpush2.msra.mxu0 0.0
        %362 = vmatprep.mubr.f32.mxu0 0.0
        %363 = vmatmul.mubr.f32.gmra.mxu0 %v293
        %v364 = vpop.f32.mrf.mxu0
        %v365 = vadd.f32 %v284, %v364
        %v366 = vpop.f32.mrf.mxu0
        %367 = vmatprep.mubr.f32.mxu0 0.0
        %368 = vmatmul.mubr.f32.gmra.mxu0 %v296
        %v369 = vpop.f32.mrf.mxu0
        %v370 = vadd.f32 %v289, %v369
        %v371 = vpop.f32.mrf.mxu0
        %372 = vdwg.mxu0
        %v373 = vlaneseq
        %v374 = vshrl.u32 %v373, 7
        %v375 = vsub.s32 0, %v374
        %v376 = vrot.slane %v200, %v375
        %v377 = vadd.f32 %v365, %v376
        %v378 = vadd.f32 %v370, %v376
        %v379 = vtanh.pop %v377
        %v380 = vtanh.pop %v378
        %v381 = vlaneseq
        %v382 = vshrl.u32 %v381, 7
        %v383 = vsub.s32 0, %v382
        %v384 = vrot.slane %v209, %v383
        %vm385 = vcmask 523264
        %v387 = vsel %vm385, %v379, 0
        %v390 = vsel %vm385, %v380, 0
        %392 = vmatprep.subr.mxu0 0.0
        %393 = vmatpush1.msra.mxu0 0.0
        %394 = vmatprep.subr.mxu0 0.0
        %395 = vmatpush1.msra.mxu0 0.0
        %396 = vmatprep.subr.mxu0 0.0
        %397 = vmatpush1.msra.mxu0 0.0
        %398 = vmatprep.subr.mxu0 0.0
        %399 = vmatpush1.msra.mxu0 0.0
        %400 = vmatprep.subr.mxu0 0.0
        %401 = vmatpush1.msra.mxu0 0.0
        %402 = vmatprep.subr.mxu0 0.0
        %403 = vmatpush1.msra.mxu0 0.0
        %404 = vmatprep.subr.mxu0 0.0
        %405 = vmatpush1.msra.mxu0 0.0
        %406 = vmatprep.subr.mxu0 0.0
        %407 = vmatpush1.msra.mxu0 0.0
        %408 = vmatprep.subr.mxu0 0.0
        %409 = vmatpush1.msra.mxu0 %v208
        %410 = vmatprep.subr.mxu0 0.0
        %411 = vmatpush1.msra.mxu0 %v207
        %412 = vmatprep.subr.mxu0 0.0
        %413 = vmatpush1.msra.mxu0 %v206
        %414 = vmatprep.subr.mxu0 0.0
        %415 = vmatpush1.msra.mxu0 %v205
        %416 = vmatprep.subr.mxu0 0.0
        %417 = vmatpush1.msra.mxu0 %v204
        %418 = vmatprep.subr.mxu0 0.0
        %419 = vmatpush1.msra.mxu0 %v203
        %420 = vmatprep.subr.mxu0 0.0
        %421 = vmatpush1.msra.mxu0 %v202
        %422 = vmatprep.subr.mxu0 0.0
        %423 = vmatpush1.msra.mxu0 %v201
        %424 = vmatprep.subr.mxu0 0.0
        %425 = vmatpush2.msra.mxu0 0.0
        %426 = vmatprep.subr.mxu0 0.0
        %427 = vmatpush2.msra.mxu0 0.0
        %428 = vmatprep.subr.mxu0 0.0
        %429 = vmatpush2.msra.mxu0 0.0
        %430 = vmatprep.subr.mxu0 0.0
        %431 = vmatpush2.msra.mxu0 0.0
        %432 = vmatprep.subr.mxu0 0.0
        %433 = vmatpush2.msra.mxu0 0.0
        %434 = vmatprep.subr.mxu0 0.0
        %435 = vmatpush2.msra.mxu0 0.0
        %436 = vmatprep.subr.mxu0 0.0
        %437 = vmatpush2.msra.mxu0 0.0
        %438 = vmatprep.subr.mxu0 0.0
        %439 = vmatpush2.msra.mxu0 0.0
        %440 = vmatprep.subr.mxu0 0.0
        %441 = vmatpush2.msra.mxu0 0.0
        %442 = vmatprep.subr.mxu0 0.0
        %443 = vmatpush2.msra.mxu0 0.0
        %444 = vmatprep.subr.mxu0 0.0
        %445 = vmatpush2.msra.mxu0 0.0
        %446 = vmatprep.subr.mxu0 0.0
        %447 = vmatpush2.msra.mxu0 0.0
        %448 = vmatprep.subr.mxu0 0.0
        %449 = vmatpush2.msra.mxu0 0.0
        %450 = vmatprep.subr.mxu0 0.0
        %451 = vmatpush2.msra.mxu0 0.0
        %452 = vmatprep.subr.mxu0 0.0
        %453 = vmatpush2.msra.mxu0 0.0
        %454 = vmatprep.subr.mxu0 0.0
        %455 = vmatpush2.msra.mxu0 0.0
        %456 = vmatprep.mubr.f32.mxu0 0.0
        %457 = vmatmul.mubr.f32.gmra.mxu0 %v387
        %v458 = vpop.f32.mrf.mxu0
        %v459 = vadd.f32 %v384, %v458
        %v460 = vpop.f32.mrf.mxu0
        %461 = vmatprep.mubr.f32.mxu0 0.0
        %462 = vmatmul.mubr.f32.gmra.mxu0 %v390
        %v463 = vpop.f32.mrf.mxu0
        %v464 = vadd.f32 %v384, %v463
        %v465 = vpop.f32.mrf.mxu0
        %466 = vdwg.mxu0
        %v467 = vtanh.pop %v459
        %v468 = vtanh.pop %v464
        %471 = vrot.lane.b32.xlu0 %v459, 16
        %v472 = vpop.permute.xlu0 %471
        %473 = vrot.lane.b32.xlu0 %v464, 16
        %v474 = vpop.permute.xlu0 %473
        %v477 = vsub.f32 %v194, %v472
        %v478 = vsub.f32 %v195, %v474
        %v479 = vsub.f32 0.0, %v467
        %v480 = vsub.f32 0.0, %v468
        %v481 = vmul.f32 %v479, 1.442695
        %v482 = vpow.pop %v481
        %v483 = vmul.f32 %v480, 1.442695
        %v484 = vpow.pop %v483
        %v485 = vmul.f32 %v477, %v482
        %v486 = vmul.f32 %v478, %v484
        %489 = vrot.lane.b32.xlu0 %v467, 112
        %v490 = vpop.permute.xlu0 %489
        %491 = vrot.lane.b32.xlu0 %v468, 112
        %v492 = vpop.permute.xlu0 %491
        %v495 = vsel %vm210, %v490, 0.0
        %496 = vadd.xlane.f32.xlu0 %v495
        %v497 = vpop.xlane.xlu0 %496
        %v498 = vsel %vm210, %v492, 0.0
        %499 = vadd.xlane.f32.xlu0 %v498
        %v500 = vpop.xlane.xlu0 %499
        %v501 = vsub.f32 0.0, %v497
        %v502 = vsub.f32 0.0, %v500
        %s503 = scalar_lea.vmem %s2, 112
        %v504 = vld [vmem:[%s503] sm:$0xff]
        %v505 = vld [vmem:[%s503 + $0x8] sm:$0xff]
        %v506 = vld [vmem:[%s503 + $0x10] sm:$0xff]
        %v507 = vld [vmem:[%s503 + $0x18] sm:$0xff]
        %v508 = vld [vmem:[%s503 + $0x20] sm:$0x1]
        %v509 = vld [vmem:[%s503 + $0x28] sm:$0xff]
        %v510 = vld [vmem:[%s503 + $0x30] sm:$0xff]
        %v511 = vld [vmem:[%s503 + $0x38] sm:$0xff]
        %v512 = vld [vmem:[%s503 + $0x40] sm:$0xff]
        %v513 = vld [vmem:[%s503 + $0x48] sm:$0xff]
        %v514 = vld [vmem:[%s503 + $0x50] sm:$0xff]
        %v515 = vld [vmem:[%s503 + $0x58] sm:$0xff]
        %v516 = vld [vmem:[%s503 + $0x60] sm:$0xff]
        %v517 = vld [vmem:[%s503 + $0x68] sm:$0x1]
        %518 = vmatprep.subr.mxu0 0.0
        %519 = vmatpush1.msra.mxu0 0.0
        %520 = vmatprep.subr.mxu0 0.0
        %521 = vmatpush1.msra.mxu0 0.0
        %522 = vmatprep.subr.mxu0 0.0
        %523 = vmatpush1.msra.mxu0 0.0
        %524 = vmatprep.subr.mxu0 0.0
        %525 = vmatpush1.msra.mxu0 0.0
        %526 = vmatprep.subr.mxu0 0.0
        %527 = vmatpush1.msra.mxu0 0.0
        %528 = vmatprep.subr.mxu0 0.0
        %529 = vmatpush1.msra.mxu0 0.0
        %530 = vmatprep.subr.mxu0 0.0
        %531 = vmatpush1.msra.mxu0 0.0
        %532 = vmatprep.subr.mxu0 0.0
        %533 = vmatpush1.msra.mxu0 0.0
        %534 = vmatprep.subr.mxu0 0.0
        %535 = vmatpush1.msra.mxu0 0.0
        %536 = vmatprep.subr.mxu0 0.0
        %537 = vmatpush1.msra.mxu0 0.0
        %538 = vmatprep.subr.mxu0 0.0
        %539 = vmatpush1.msra.mxu0 0.0
        %540 = vmatprep.subr.mxu0 0.0
        %541 = vmatpush1.msra.mxu0 0.0
        %542 = vmatprep.subr.mxu0 0.0
        %543 = vmatpush1.msra.mxu0 0.0
        %544 = vmatprep.subr.mxu0 0.0
        %545 = vmatpush1.msra.mxu0 0.0
        %546 = vmatprep.subr.mxu0 0.0
        %547 = vmatpush1.msra.mxu0 %v507
        %548 = vmatprep.subr.mxu0 0.0
        %549 = vmatpush1.msra.mxu0 %v506
        %550 = vmatprep.subr.mxu0 0.0
        %551 = vmatpush2.msra.mxu0 0.0
        %552 = vmatprep.subr.mxu0 0.0
        %553 = vmatpush2.msra.mxu0 0.0
        %554 = vmatprep.subr.mxu0 0.0
        %555 = vmatpush2.msra.mxu0 0.0
        %556 = vmatprep.subr.mxu0 0.0
        %557 = vmatpush2.msra.mxu0 0.0
        %558 = vmatprep.subr.mxu0 0.0
        %559 = vmatpush2.msra.mxu0 0.0
        %560 = vmatprep.subr.mxu0 0.0
        %561 = vmatpush2.msra.mxu0 0.0
        %562 = vmatprep.subr.mxu0 0.0
        %563 = vmatpush2.msra.mxu0 0.0
        %564 = vmatprep.subr.mxu0 0.0
        %565 = vmatpush2.msra.mxu0 0.0
        %566 = vmatprep.subr.mxu0 0.0
        %567 = vmatpush2.msra.mxu0 0.0
        %568 = vmatprep.subr.mxu0 0.0
        %569 = vmatpush2.msra.mxu0 0.0
        %570 = vmatprep.subr.mxu0 0.0
        %571 = vmatpush2.msra.mxu0 0.0
        %572 = vmatprep.subr.mxu0 0.0
        %573 = vmatpush2.msra.mxu0 0.0
        %574 = vmatprep.subr.mxu0 0.0
        %575 = vmatpush2.msra.mxu0 0.0
        %576 = vmatprep.subr.mxu0 0.0
        %577 = vmatpush2.msra.mxu0 0.0
        %578 = vmatprep.subr.mxu0 0.0
        %579 = vmatpush2.msra.mxu0 0.0
        %580 = vmatprep.subr.mxu0 0.0
        %581 = vmatpush2.msra.mxu0 0.0
        %582 = vmatprep.mubr.f32.mxu0 0.0
        %583 = vmatmul.mubr.f32.gmra.mxu0 %v212
        %v584 = vpop.f32.mrf.mxu0
        %v585 = vadd.f32 0.0, %v584
        %v586 = vpop.f32.mrf.mxu0
        %587 = vmatprep.mubr.f32.mxu0 0.0
        %588 = vmatmul.mubr.f32.gmra.mxu0 %v215
        %v589 = vpop.f32.mrf.mxu0
        %v590 = vadd.f32 0.0, %v589
        %v591 = vpop.f32.mrf.mxu0
        %592 = vdwg.mxu0
        %595 = vrot.lane.b32.xlu0 %v485, 112
        %v596 = vpop.permute.xlu0 %595
        %597 = vrot.lane.b32.xlu0 %v486, 112
        %v598 = vpop.permute.xlu0 %597
        %v599 = vsel %vm210, %v596, 0
        %v601 = vsel %vm210, %v598, 0
        %603 = vmatprep.subr.mxu0 0.0
        %604 = vmatpush1.msra.mxu0 0.0
        %605 = vmatprep.subr.mxu0 0.0
        %606 = vmatpush1.msra.mxu0 0.0
        %607 = vmatprep.subr.mxu0 0.0
        %608 = vmatpush1.msra.mxu0 0.0
        %609 = vmatprep.subr.mxu0 0.0
        %610 = vmatpush1.msra.mxu0 0.0
        %611 = vmatprep.subr.mxu0 0.0
        %612 = vmatpush1.msra.mxu0 0.0
        %613 = vmatprep.subr.mxu0 0.0
        %614 = vmatpush1.msra.mxu0 0.0
        %615 = vmatprep.subr.mxu0 0.0
        %616 = vmatpush1.msra.mxu0 0.0
        %617 = vmatprep.subr.mxu0 0.0
        %618 = vmatpush1.msra.mxu0 0.0
        %619 = vmatprep.subr.mxu0 0.0
        %620 = vmatpush1.msra.mxu0 0.0
        %621 = vmatprep.subr.mxu0 0.0
        %622 = vmatpush1.msra.mxu0 0.0
        %623 = vmatprep.subr.mxu0 0.0
        %624 = vmatpush1.msra.mxu0 0.0
        %625 = vmatprep.subr.mxu0 0.0
        %626 = vmatpush1.msra.mxu0 0.0
        %627 = vmatprep.subr.mxu0 0.0
        %628 = vmatpush1.msra.mxu0 0.0
        %629 = vmatprep.subr.mxu0 0.0
        %630 = vmatpush1.msra.mxu0 0.0
        %631 = vmatprep.subr.mxu0 0.0
        %632 = vmatpush1.msra.mxu0 %v505
        %633 = vmatprep.subr.mxu0 0.0
        %634 = vmatpush1.msra.mxu0 %v504
        %635 = vmatprep.subr.mxu0 0.0
        %636 = vmatpush2.msra.mxu0 0.0
        %637 = vmatprep.subr.mxu0 0.0
        %638 = vmatpush2.msra.mxu0 0.0
        %639 = vmatprep.subr.mxu0 0.0
        %640 = vmatpush2.msra.mxu0 0.0
        %641 = vmatprep.subr.mxu0 0.0
        %642 = vmatpush2.msra.mxu0 0.0
        %643 = vmatprep.subr.mxu0 0.0
        %644 = vmatpush2.msra.mxu0 0.0
        %645 = vmatprep.subr.mxu0 0.0
        %646 = vmatpush2.msra.mxu0 0.0
        %647 = vmatprep.subr.mxu0 0.0
        %648 = vmatpush2.msra.mxu0 0.0
        %649 = vmatprep.subr.mxu0 0.0
        %650 = vmatpush2.msra.mxu0 0.0
        %651 = vmatprep.subr.mxu0 0.0
        %652 = vmatpush2.msra.mxu0 0.0
        %653 = vmatprep.subr.mxu0 0.0
        %654 = vmatpush2.msra.mxu0 0.0
        %655 = vmatprep.subr.mxu0 0.0
        %656 = vmatpush2.msra.mxu0 0.0
        %657 = vmatprep.subr.mxu0 0.0
        %658 = vmatpush2.msra.mxu0 0.0
        %659 = vmatprep.subr.mxu0 0.0
        %660 = vmatpush2.msra.mxu0 0.0
        %661 = vmatprep.subr.mxu0 0.0
        %662 = vmatpush2.msra.mxu0 0.0
        %663 = vmatprep.subr.mxu0 0.0
        %664 = vmatpush2.msra.mxu0 0.0
        %665 = vmatprep.subr.mxu0 0.0
        %666 = vmatpush2.msra.mxu0 0.0
        %667 = vmatprep.mubr.f32.mxu0 0.0
        %668 = vmatmul.mubr.f32.gmra.mxu0 %v599
        %v669 = vpop.f32.mrf.mxu0
        %v670 = vadd.f32 %v585, %v669
        %v671 = vpop.f32.mrf.mxu0
        %672 = vmatprep.mubr.f32.mxu0 0.0
        %673 = vmatmul.mubr.f32.gmra.mxu0 %v601
        %v674 = vpop.f32.mrf.mxu0
        %v675 = vadd.f32 %v590, %v674
        %v676 = vpop.f32.mrf.mxu0
        %677 = vdwg.mxu0
        %v678 = vlaneseq
        %v679 = vshrl.u32 %v678, 7
        %v680 = vsub.s32 0, %v679
        %v681 = vrot.slane %v508, %v680
        %v682 = vadd.f32 %v670, %v681
        %v683 = vadd.f32 %v675, %v681
        %v684 = vtanh.pop %v682
        %v685 = vtanh.pop %v683
        %v686 = vlaneseq
        %v687 = vshrl.u32 %v686, 7
        %v688 = vsub.s32 0, %v687
        %v689 = vrot.slane %v517, %v688
        %v691 = vsel %vm385, %v684, 0
        %v694 = vsel %vm385, %v685, 0
        %696 = vmatprep.subr.mxu0 0.0
        %697 = vmatpush1.msra.mxu0 0.0
        %698 = vmatprep.subr.mxu0 0.0
        %699 = vmatpush1.msra.mxu0 0.0
        %700 = vmatprep.subr.mxu0 0.0
        %701 = vmatpush1.msra.mxu0 0.0
        %702 = vmatprep.subr.mxu0 0.0
        %703 = vmatpush1.msra.mxu0 0.0
        %704 = vmatprep.subr.mxu0 0.0
        %705 = vmatpush1.msra.mxu0 0.0
        %706 = vmatprep.subr.mxu0 0.0
        %707 = vmatpush1.msra.mxu0 0.0
        %708 = vmatprep.subr.mxu0 0.0
        %709 = vmatpush1.msra.mxu0 0.0
        %710 = vmatprep.subr.mxu0 0.0
        %711 = vmatpush1.msra.mxu0 0.0
        %712 = vmatprep.subr.mxu0 0.0
        %713 = vmatpush1.msra.mxu0 %v516
        %714 = vmatprep.subr.mxu0 0.0
        %715 = vmatpush1.msra.mxu0 %v515
        %716 = vmatprep.subr.mxu0 0.0
        %717 = vmatpush1.msra.mxu0 %v514
        %718 = vmatprep.subr.mxu0 0.0
        %719 = vmatpush1.msra.mxu0 %v513
        %720 = vmatprep.subr.mxu0 0.0
        %721 = vmatpush1.msra.mxu0 %v512
        %722 = vmatprep.subr.mxu0 0.0
        %723 = vmatpush1.msra.mxu0 %v511
        %724 = vmatprep.subr.mxu0 0.0
        %725 = vmatpush1.msra.mxu0 %v510
        %726 = vmatprep.subr.mxu0 0.0
        %727 = vmatpush1.msra.mxu0 %v509
        %728 = vmatprep.subr.mxu0 0.0
        %729 = vmatpush2.msra.mxu0 0.0
        %730 = vmatprep.subr.mxu0 0.0
        %731 = vmatpush2.msra.mxu0 0.0
        %732 = vmatprep.subr.mxu0 0.0
        %733 = vmatpush2.msra.mxu0 0.0
        %734 = vmatprep.subr.mxu0 0.0
        %735 = vmatpush2.msra.mxu0 0.0
        %736 = vmatprep.subr.mxu0 0.0
        %737 = vmatpush2.msra.mxu0 0.0
        %738 = vmatprep.subr.mxu0 0.0
        %739 = vmatpush2.msra.mxu0 0.0
        %740 = vmatprep.subr.mxu0 0.0
        %741 = vmatpush2.msra.mxu0 0.0
        %742 = vmatprep.subr.mxu0 0.0
        %743 = vmatpush2.msra.mxu0 0.0
        %744 = vmatprep.subr.mxu0 0.0
        %745 = vmatpush2.msra.mxu0 0.0
        %746 = vmatprep.subr.mxu0 0.0
        %747 = vmatpush2.msra.mxu0 0.0
        %748 = vmatprep.subr.mxu0 0.0
        %749 = vmatpush2.msra.mxu0 0.0
        %750 = vmatprep.subr.mxu0 0.0
        %751 = vmatpush2.msra.mxu0 0.0
        %752 = vmatprep.subr.mxu0 0.0
        %753 = vmatpush2.msra.mxu0 0.0
        %754 = vmatprep.subr.mxu0 0.0
        %755 = vmatpush2.msra.mxu0 0.0
        %756 = vmatprep.subr.mxu0 0.0
        %757 = vmatpush2.msra.mxu0 0.0
        %758 = vmatprep.subr.mxu0 0.0
        %759 = vmatpush2.msra.mxu0 0.0
        %760 = vmatprep.mubr.f32.mxu0 0.0
        %761 = vmatmul.mubr.f32.gmra.mxu0 %v691
        %v762 = vpop.f32.mrf.mxu0
        %v763 = vadd.f32 %v689, %v762
        %v764 = vpop.f32.mrf.mxu0
        %765 = vmatprep.mubr.f32.mxu0 0.0
        %766 = vmatmul.mubr.f32.gmra.mxu0 %v694
        %v767 = vpop.f32.mrf.mxu0
        %v768 = vadd.f32 %v689, %v767
        %v769 = vpop.f32.mrf.mxu0
        %770 = vdwg.mxu0
        %v771 = vtanh.pop %v763
        %v772 = vtanh.pop %v768
        %v773 = vsub.f32 %v194, %v763
        %v774 = vsub.f32 %v195, %v768
        %v775 = vsub.f32 0.0, %v771
        %v776 = vsub.f32 0.0, %v772
        %v777 = vmul.f32 %v775, 1.442695
        %v778 = vpow.pop %v777
        %v779 = vmul.f32 %v776, 1.442695
        %v780 = vpow.pop %v779
        %783 = vrot.lane.b32.xlu0 %v778, 112
        %v784 = vpop.permute.xlu0 %783
        %785 = vrot.lane.b32.xlu0 %v780, 112
        %v786 = vpop.permute.xlu0 %785
        %v789 = vmul.f32 %v773, %v784
        %v790 = vmul.f32 %v774, %v786
        %793 = vrot.lane.b32.xlu0 %v771, 112
        %v794 = vpop.permute.xlu0 %793
        %795 = vrot.lane.b32.xlu0 %v772, 112
        %v796 = vpop.permute.xlu0 %795
        %v799 = vsel %vm210, %v794, 0.0
        %800 = vadd.xlane.f32.xlu0 %v799
        %v801 = vpop.xlane.xlu0 %800
        %v802 = vsel %vm210, %v796, 0.0
        %803 = vadd.xlane.f32.xlu0 %v802
        %v804 = vpop.xlane.xlu0 %803
        %v805 = vsub.f32 %v501, %v801
        %v806 = vsub.f32 %v502, %v804
        %v807 = vmul.f32 %v789, %v789
        %v808 = vmul.f32 %v790, %v790
        %v809 = vmul.f32 %v485, %v485
        %v810 = vmul.f32 %v486, %v486
        %813 = vrot.lane.b32.xlu0 %v809, 112
        %v814 = vpop.permute.xlu0 %813
        %815 = vrot.lane.b32.xlu0 %v810, 112
        %v816 = vpop.permute.xlu0 %815
        %v819 = vadd.f32 %v807, %v814
        %v820 = vadd.f32 %v808, %v816
        %v821 = vsel %vm210, %v819, 0.0
        %822 = vadd.xlane.f32.xlu0 %v821
        %v823 = vpop.xlane.xlu0 %822
        %v824 = vsel %vm210, %v820, 0.0
        %825 = vadd.xlane.f32.xlu0 %v824
        %v826 = vpop.xlane.xlu0 %825
        %v827 = vmul.f32 %v823, -0.5
        %v828 = vmul.f32 %v826, -0.5
        %v829 = vsub.f32 %v827, 29.406033
        %v830 = vsub.f32 %v828, 29.406033
        %v831 = vadd.f32 %v829, %v805
        %v832 = vadd.f32 %v830, %v806
        %833 = vxpose.xlu0.b32.start [1/16] %v831, 128
        %834 = vxpose.xlu0.b32.cont [2/16] %v832, 128
        %835 = vxpose.xlu0.b32.cont [3/16] 0.0, 128
        %836 = vxpose.xlu0.b32.cont [4/16] 0.0, 128
        %837 = vxpose.xlu0.b32.cont [5/16] 0.0, 128
        %838 = vxpose.xlu0.b32.cont [6/16] 0.0, 128
        %839 = vxpose.xlu0.b32.cont [7/16] 0.0, 128
        %840 = vxpose.xlu0.b32.cont [8/16] 0.0, 128
        %841 = vxpose.xlu0.b32.cont [9/16] 0.0, 128
        %842 = vxpose.xlu0.b32.cont [10/16] 0.0, 128
        %843 = vxpose.xlu0.b32.cont [11/16] 0.0, 128
        %844 = vxpose.xlu0.b32.cont [12/16] 0.0, 128
        %845 = vxpose.xlu0.b32.cont [13/16] 0.0, 128
        %846 = vxpose.xlu0.b32.cont [14/16] 0.0, 128
        %847 = vxpose.xlu0.b32.cont [15/16] 0.0, 128
        %848 = vxpose.xlu0.b32.end [16/16] 0.0, 128
        %v849 = vpop.trf.xlu0
        %v850 = vpop.trf.xlu0
        %v851 = vpop.trf.xlu0
        %v852 = vpop.trf.xlu0
        %v853 = vpop.trf.xlu0
        %v854 = vpop.trf.xlu0
        %v855 = vpop.trf.xlu0
        %v856 = vpop.trf.xlu0
        %v857 = vpop.trf.xlu0
        %v858 = vpop.trf.xlu0
        %v859 = vpop.trf.xlu0
        %v860 = vpop.trf.xlu0
        %v861 = vpop.trf.xlu0
        %v862 = vpop.trf.xlu0
        %v863 = vpop.trf.xlu0
        %v864 = vpop.trf.xlu0
        %vm865 = vcmask 122880
        %866 = vst.msk [vmem:[%s179] sm:$0x1] %vm865, %v849
        %s867 = sand.u32 %s98, 1
        %s868 = scalar_lea.sflag [#allocation3], %s867
        %s869 = sand.u32 %s98, 1
        %s870 = scalar_lea.vmem [#allocation2], %s869
        // Predicated region
        $region33: #{tpu_custom_call.1} parent=31 // pred_check
          %p871 = pneg %p108
        $region34: #{tpu_custom_call.1} parent=31 // pred_check_branch
          %873 = sbr.rel (%p871) target = $region36
        $region35: #{tpu_custom_call.1} parent=31 // pred_region
          %s875 = ssub.s32 16, 16
          %876 = vsyncadd %s868, %s875
          %s877 = smul.addr %s17, 16
          %s878 = scalar_lea.hbm %s3, %s877
          %s880 = sshll.u32 %s870, 4
          %s881 = int_to_ptr.vmem [resolvable:$true] %s880
          %883 = dma.vmem_to_hbm [thread:$0]  %s881, 16, %s878, %s868
        $region36: #{tpu_custom_call.1} parent=31 // pred_fallthru
          _
      $region32: #{tpu_custom_call.1} parent=5 // pred_fallthru
        _
      %p884 = scmp.le.s32.totalorder 2, %s12
      // Predicated region
      $region37: #{tpu_custom_call.1} parent=5 // pred_check
        %p885 = pneg %p884
      $region38: #{tpu_custom_call.1} parent=5 // pred_check_branch
        %887 = sbr.rel (%p885) target = $region40
      $region39: #{tpu_custom_call.1} parent=5 // pred_region
        %s888 = ssub.s32 %s12, 2
        // Predicated region
        $region41: #{tpu_custom_call.1} parent=39 // pred_check
          %p889 = pneg %p114
        $region42: #{tpu_custom_call.1} parent=39 // pred_check_branch
          %891 = sbr.rel (%p889) target = $region44
        $region43: #{tpu_custom_call.1} parent=39 // pred_region
          %s892 = sand.u32 %s99, 1
          %s893 = scalar_lea.sflag [#allocation3], %s892
          %s894 = sand.u32 %s99, 1
          %s895 = scalar_lea.vmem [#allocation2], %s894
          %896 = dma.done %s893, 16
        $region44: #{tpu_custom_call.1} parent=39 // pred_fallthru
          _
      $region40: #{tpu_custom_call.1} parent=5 // pred_fallthru
        _
    $region6: #{tpu_custom_call.1} parent=1 // loop_footer
      %s16 = sadd.s32 1, %s12
    $region7: #{tpu_custom_call.1} parent=1 // loop_footer_branch
      %11 = sbr.rel target = $region3
    $region8: #{tpu_custom_call.1} parent=1 // loop_exit
      _
    %897 = vsyncpa [#allocation3], 1
    %s898 = scalar_lea.sflag [#allocation3], 1
    %899 = vsyncpa %s898, 1

</llo_original>
